<compile_context>
chip_gen: v5e
topology: v5e:2x2
jax: 0.10.0
libtpu: 0.0.40
codegen_flags: <defaults>
</compile_context>

<pallas_src>
import functools

import jax
import jax.numpy as jnp
from jax.experimental import pallas as pl
from jax.experimental.pallas import tpu as pltpu

BN_EPS = 1e-5


def _round_up(x, m):
    return ((x + m - 1) // m) * m


def _fold_bn(col_sum, col_sq, gamma, beta, batch):
    """Fold batch statistics into per-column scale/shift (single FMA to apply)."""
    inv_n = jnp.float32(1.0 / batch)
    mean = col_sum * inv_n
    var = jnp.maximum(col_sq * inv_n - mean * mean, 0.0)
    inv = jax.lax.rsqrt(var + BN_EPS)
    scale = gamma * inv
    shift = beta - mean * scale
    return scale, shift


def _head(ph, w2_ref, w3_ref, bias_ref, fc1_p, act_p):
    """fc1_a (relu) + fc_actor (tanh) on already-normalized activations."""
    a = jnp.dot(ph.astype(jnp.bfloat16), w2_ref[...],
                preferred_element_type=jnp.float32) + bias_ref[3:4, :fc1_p]
    a = jnp.maximum(a, 0.0)
    y = jnp.dot(a.astype(jnp.bfloat16), w3_ref[...],
                preferred_element_type=jnp.float32) + bias_ref[4:5, :act_p]
    return jnp.tanh(y)


# ---------------------------------------------------------------------------
# Path A: whole batch in a single grid step (typical actor batch sizes).
# ---------------------------------------------------------------------------
def _actor_single_kernel(x_ref, w1_ref, w2_ref, w3_ref, bias_ref, out_ref,
                         *, batch, base_p, fc1_p, act_p):
    p = jnp.dot(x_ref[...], w1_ref[...],
                preferred_element_type=jnp.float32) + bias_ref[0:1, :base_p]
    p = jnp.maximum(p, 0.0)                                   # [b_pad, base_p] f32

    b_pad = out_ref.shape[0]
    if batch != b_pad:
        row = jax.lax.broadcasted_iota(jnp.int32, (b_pad, 1), 0)
        pm = jnp.where(row < batch, p, 0.0)                   # mask padded rows
    else:
        pm = p

    # Keep BN statistics in f32 (avoid bf16 rounding in E[x^2]-E[x]^2).
    col_sum = jnp.sum(pm, axis=0, keepdims=True)
    col_sq = jnp.sum(pm * pm, axis=0, keepdims=True)
    scale, shift = _fold_bn(col_sum, col_sq,
                            bias_ref[1:2, :base_p], bias_ref[2:3, :base_p], batch)

    out_ref[...] = _head(p * scale + shift, w2_ref, w3_ref, bias_ref, fc1_p, act_p)


# ---------------------------------------------------------------------------
# Path B: two-phase grid with persistent fc_phi1 activations (large batches).
#   phase 0: p = relu(x @ w1 + b1) -> p_store; accumulate sum / sumsq
#   phase 1: folded BN + fc1_a + fc_actor from p_store (no x re-read / recompute)
# ---------------------------------------------------------------------------
def _actor_tiled_kernel(x_ref, w1_ref, w2_ref, w3_ref, bias_ref, out_ref,
                        p_store, sum_ref, sq_ref, scale_ref, shift_ref,
                        *, batch, tile_b, base_p, fc1_p, act_p):
    phase = pl.program_id(0)
    bt = pl.program_id(1)
    nbt = pl.num_programs(1)

    @pl.when(phase == 0)
    def _():
        p = jnp.dot(x_ref[...], w1_ref[...],
                    preferred_element_type=jnp.float32) + bias_ref[0:1, :base_p]
        p = jnp.maximum(p, 0.0)                               # [tile_b, base_p] f32

        if batch % tile_b == 0:
            pm = p
        else:
            row = bt * tile_b + jax.lax.broadcasted_iota(
                jnp.int32, (tile_b, 1), 0)
            pm = jnp.where(row < batch, p, 0.0)

        # Persist activations so phase 1 never re-reads x or redoes fc_phi1.
        p_store[bt] = pm

        @pl.when(bt == 0)
        def _():
            sum_ref[...] = jnp.zeros_like(sum_ref)
            sq_ref[...] = jnp.zeros_like(sq_ref)

        sum_ref[...] += jnp.sum(pm, axis=0, keepdims=True)
        sq_ref[...] += jnp.sum(pm * pm, axis=0, keepdims=True)

        @pl.when(bt == nbt - 1)
        def _():
            scale, shift = _fold_bn(sum_ref[...], sq_ref[...],
                                    bias_ref[1:2, :base_p],
                                    bias_ref[2:3, :base_p], batch)
            scale_ref[...] = scale
            shift_ref[...] = shift

    @pl.when(phase == 1)
    def _():
        ph = p_store[bt] * scale_ref[...] + shift_ref[...]    # single FMA per element
        out_ref[...] = _head(ph, w2_ref, w3_ref, bias_ref, fc1_p, act_p)


# ---------------------------------------------------------------------------
# Parameter packing / wrapper
# ---------------------------------------------------------------------------
def pack_params(params):
    """Pad feature dims to 128-lane multiples, cast weights to bf16 and pack the
    five small 1-D params into a single [8, P] f32 array (one DMA)."""
    w1 = params["w_phi1"]; w2 = params["w_fc1a"]; w3 = params["w_actor"]
    s, base = w1.shape
    fc1 = w2.shape[1]
    act = w3.shape[1]
    base_p, fc1_p, act_p = (_round_up(d, 128) for d in (base, fc1, act))
    p_lanes = max(base_p, fc1_p, act_p)

    def pad2(w, rows, cols):
        return jnp.pad(w, ((0, rows - w.shape[0]), (0, cols - w.shape[1])))

    w1p = pad2(w1, s, base_p).astype(jnp.bfloat16)
    w2p = pad2(w2, base_p, fc1_p).astype(jnp.bfloat16)
    w3p = pad2(w3, fc1_p, act_p).astype(jnp.bfloat16)

    def pad_row(v):
        v = jnp.asarray(v, jnp.float32).reshape(1, -1)
        return jnp.pad(v, ((0, 0), (0, p_lanes - v.shape[1])))

    bias = jnp.concatenate(
        [pad_row(params["b_phi1"]),     # row 0
         pad_row(params["bn_gamma"]),   # row 1
         pad_row(params["bn_beta"]),    # row 2
         pad_row(params["b_fc1a"]),     # row 3
         pad_row(params["b_actor"]),    # row 4
         jnp.zeros((3, p_lanes), jnp.float32)],  # pad to 8 sublanes
        axis=0)

    return dict(w1=w1p, w2=w2p, w3=w3p, bias=bias,
                base_p=base_p, fc1_p=fc1_p, act_p=act_p, action_size=act)


def actor_forward(state, packed, tile_b=256, single_step_max_rows=1024):
    """state: [B, state_size] f32; packed: output of pack_params.

    tile_b=256 fills the 256-wide MXU on v6e/v7x; on v5e (128-wide MXU) a
    256-row tile simply takes two MXU passes while halving grid-step overhead.
    """
    b, s = state.shape
    base_p, fc1_p, act_p = packed["base_p"], packed["fc1_p"], packed["act_p"]
    p_lanes = packed["bias"].shape[1]
    action_size = packed["action_size"]

    x = state.astype(jnp.bfloat16)   # matmul operand dtype anyway -> halves x DMA
    weights = (packed["w1"], packed["w2"], packed["w3"], packed["bias"])

    def const(*_):
        return (0, 0)

    w_specs = [pl.BlockSpec((s, base_p), const),       # w1 (bf16, VMEM-resident)
               pl.BlockSpec((base_p, fc1_p), const),   # w2
               pl.BlockSpec((fc1_p, act_p), const),    # w3
               pl.BlockSpec((8, p_lanes), const)]      # packed biases / BN params

    def cost(b_pad):
        flops = 2 * b_pad * (s * base_p + base_p * fc1_p + fc1_p * act_p)
        bytes_accessed = (b_pad * s * 2
                          + packed["w1"].size * 2 + packed["w2"].size * 2
                          + packed["w3"].size * 2 + packed["bias"].size * 4
                          + b_pad * act_p * 4)
        return pl.CostEstimate(flops=flops,
                               transcendentals=base_p + b_pad * act_p,
                               bytes_accessed=bytes_accessed)

    # ---------------- Path A: single grid step --------------------------------
    b_single = _round_up(b, 16)
    if b_single <= single_step_max_rows:
        xp = x if b_single == b else jnp.pad(x, ((0, b_single - b), (0, 0)))
        kernel = functools.partial(_actor_single_kernel, batch=b,
                                   base_p=base_p, fc1_p=fc1_p, act_p=act_p)
        out_padded = pl.pallas_call(
            kernel,
            out_shape=jax.ShapeDtypeStruct((b_single, act_p), jnp.float32),
            grid=(1,),
            in_specs=[pl.BlockSpec((b_single, s), lambda i: (0, 0))] + w_specs,
            out_specs=pl.BlockSpec((b_single, act_p), lambda i: (0, 0)),
            compiler_params=pltpu.CompilerParams(
                dimension_semantics=("arbitrary",)),
            cost_estimate=cost(b_single),
        )(xp, *weights)
        return out_padded[:b, :action_size]

    # ---------------- Path B: two-phase tiled, persistent activations ---------
    tile = _round_up(min(tile_b, _round_up(b, 16)), 16)
    b_pad = _round_up(b, tile)
    nbt = b_pad // tile
    xp = x if b_pad == b else jnp.pad(x, ((0, b_pad - b), (0, 0)))

    kernel = functools.partial(_actor_tiled_kernel, batch=b, tile_b=tile,
                               base_p=base_p, fc1_p=fc1_p, act_p=act_p)

    # VMEM budget: persistent-p scratch dominates for very large batches.
    # Only raise the scoped limit when the default would be tight.
    # TODO(synk): for huge batches on v7x (64 MiB physical VMEM) store p_store
    # as bf16 or cap the per-call batch instead of raising the limit further.
    p_store_bytes = b_pad * base_p * 4
    weight_bytes = (2 * (packed["w1"].size + packed["w2"].size
                         + packed["w3"].size) * 2 + packed["bias"].size * 4)
    tile_bytes = 2 * tile * (s * 2 + act_p * 4) + tile * (base_p + fc1_p + act_p) * 4
    vmem_needed = p_store_bytes + weight_bytes + tile_bytes + (2 << 20)
    vmem_limit = None if vmem_needed < (12 << 20) else int(vmem_needed * 1.25)

    out_padded = pl.pallas_call(
        kernel,
        out_shape=jax.ShapeDtypeStruct((b_pad, act_p), jnp.float32),
        grid=(2, nbt),                       # (phase, batch-tile)
        in_specs=[
            # x: block bt in phase 0; pinned to the last (already-resident)
            # block in phase 1 -> no re-DMA of x in phase 1.
            pl.BlockSpec((tile, s),
                         lambda ph, bt: (bt * (1 - ph) + (nbt - 1) * ph, 0)),
        ] + w_specs,
        # Output: all phase-0 steps alias block 0 (never written there), so
        # phase 0 performs no zero-fill and no HBM writeback; phase 1 writes
        # each block exactly once.
        out_specs=pl.BlockSpec((tile, act_p), lambda ph, bt: (bt * ph, 0)),
        scratch_shapes=[pltpu.VMEM((nbt, tile, base_p), jnp.float32),  # persistent p
                        pltpu.VMEM((1, base_p), jnp.float32),          # sum
                        pltpu.VMEM((1, base_p), jnp.float32),          # sumsq
                        pltpu.VMEM((1, base_p), jnp.float32),          # scale
                        pltpu.VMEM((1, base_p), jnp.float32)],         # shift
        compiler_params=pltpu.CompilerParams(
            dimension_semantics=("arbitrary", "arbitrary"),
            vmem_limit_bytes=vmem_limit),
        cost_estimate=cost(b_pad),
    )(xp, *weights)
    return out_padded[:b, :action_size]


# ---------------------------------------------------------------------------
# Params init + references
# ---------------------------------------------------------------------------
def init_params(key, state_size, base_units, fc1_units, action_size):
    """nn.Linear default init (uniform +/- 1/sqrt(fan_in)); BatchNorm gamma=1,
    beta=0. Weights stored [in, out] (pre-transposed)."""
    ks = jax.random.split(key, 6)

    def linear(kw, kb, fan_in, fan_out):
        bound = 1.0 / jnp.sqrt(jnp.float32(fan_in))
        w = jax.random.uniform(kw, (fan_in, fan_out), jnp.float32, -bound, bound)
        b = jax.random.uniform(kb, (1, fan_out), jnp.float32, -bound, bound)
        return w, b

    w1, b1 = linear(ks[0], ks[1], state_size, base_units)
    w2, b2 = linear(ks[2], ks[3], base_units, fc1_units)
    w3, b3 = linear(ks[4], ks[5], fc1_units, action_size)
    return dict(
        w_phi1=w1, b_phi1=b1,
        bn_gamma=jnp.ones((1, base_units), jnp.float32),
        bn_beta=jnp.zeros((1, base_units), jnp.float32),
        w_fc1a=w2, b_fc1a=b2,
        w_actor=w3, b_actor=b3,
    )


def _reference_mixed(state, p):
    """Pure-JAX reference mirroring the kernel numerics (bf16 matmul operands,
    f32 accumulation, folded BN)."""
    def mm(a, w):
        return jnp.dot(a.astype(jnp.bfloat16), w.astype(jnp.bfloat16),
                       preferred_element_type=jnp.float32)

    x = jnp.maximum(mm(state, p["w_phi1"]) + p["b_phi1"], 0.0)
    mean = jnp.mean(x, axis=0, keepdims=True)
    var = jnp.maximum(jnp.mean(x * x, axis=0, keepdims=True) - mean * mean, 0.0)
    inv = jax.lax.rsqrt(var + BN_EPS)
    scale = p["bn_gamma"] * inv
    shift = p["bn_beta"] - mean * scale
    x = x * scale + shift
    a = jnp.maximum(mm(x, p["w_fc1a"]) + p["b_fc1a"], 0.0)
    return jnp.tanh(mm(a, p["w_actor"]) + p["b_actor"])


def _reference_f32(state, p):
    """Pure-f32 PyTorch-semantics reference (training-mode BatchNorm)."""
    x = jnp.maximum(state @ p["w_phi1"] + p["b_phi1"], 0.0)
    mean = jnp.mean(x, axis=0, keepdims=True)
    var = jnp.mean((x - mean) ** 2, axis=0, keepdims=True)
    x = p["bn_gamma"] * (x - mean) / jnp.sqrt(var + BN_EPS) + p["bn_beta"]
    a = jnp.maximum(x @ p["w_fc1a"] + p["b_fc1a"], 0.0)
    return jnp.tanh(a @ p["w_actor"] + p["b_actor"])


if __name__ == "__main__":
    # Small, forward-consistent shapes (module defaults are base=512, fc1=256;
    # scaled down here for a quick synthetic run — structure is identical).
    BATCH, STATE_SIZE, BASE_UNITS, FC1_UNITS, ACTION_SIZE = 8, 16, 128, 64, 8

    key = jax.random.PRNGKey(0)
    k_state, k_params, k_state2 = jax.random.split(key, 3)
    params = init_params(k_params, STATE_SIZE, BASE_UNITS, FC1_UNITS, ACTION_SIZE)
    packed = pack_params(params)

    # Path A: single-grid-step kernel (whole batch resident in VMEM).
    state = jax.random.normal(k_state, (BATCH, STATE_SIZE), jnp.float32)
    out = jax.block_until_ready(actor_forward(state, packed))
    assert out.shape == (BATCH, ACTION_SIZE)
    assert jnp.allclose(out, _reference_mixed(state, params), atol=5e-4, rtol=5e-4), \
        "single-step path: mismatch vs bf16-matched reference"
    assert jnp.allclose(out, _reference_f32(state, params), atol=5e-2, rtol=5e-2), \
        "single-step path: mismatch vs f32 reference"

    # Path B: two-phase tiled kernel with persistent activations, forced here
    # with a tiny threshold so the large-batch code path is also exercised
    # (300 rows, tile=128 -> 3 batch tiles incl. a masked partial tile).
    B2 = 300
    state2 = jax.random.normal(k_state2, (B2, STATE_SIZE), jnp.float32)
    out2 = jax.block_until_ready(
        actor_forward(state2, packed, tile_b=128, single_step_max_rows=0))
    assert out2.shape == (B2, ACTION_SIZE)
    assert jnp.allclose(out2, _reference_mixed(state2, params), atol=2e-3, rtol=2e-3), \
        "tiled path: mismatch vs bf16-matched reference"
    assert jnp.allclose(out2, _reference_f32(state2, params), atol=5e-2, rtol=5e-2), \
        "tiled path: mismatch vs f32 reference"

    print("KERNEL_OK")
</pallas_src>

<mosaic_0001>
module attributes {stable_mosaic.version = 11 : i64} {
  func.func @_actor_single_kernel(%arg0: i32, %arg1: memref<16x16xbf16, #tpu.memory_space<vmem>>, %arg2: memref<16x128xbf16, #tpu.memory_space<vmem>>, %arg3: memref<128x128xbf16, #tpu.memory_space<vmem>>, %arg4: memref<128x128xbf16, #tpu.memory_space<vmem>>, %arg5: memref<8x128xf32, #tpu.memory_space<vmem>>, %arg6: memref<16x128xf32, #tpu.memory_space<vmem>>) attributes {dimension_semantics = [#tpu.dimension_semantics<arbitrary>], iteration_bounds = array<i64: 1>, scalar_prefetch = 0 : i64, scratch_operands = 0 : i64, tpu.core_type = #tpu.core_type<tc>, window_params = [{pipeline_mode = #tpu.pipeline_mode<synchronous>, transform_indices = @transform_0, window_bounds = array<i64: 16, 16>}, {pipeline_mode = #tpu.pipeline_mode<synchronous>, transform_indices = @transform_1, window_bounds = array<i64: 16, 128>}, {pipeline_mode = #tpu.pipeline_mode<synchronous>, transform_indices = @transform_2, window_bounds = array<i64: 128, 128>}, {pipeline_mode = #tpu.pipeline_mode<synchronous>, transform_indices = @transform_3, window_bounds = array<i64: 128, 128>}, {pipeline_mode = #tpu.pipeline_mode<synchronous>, transform_indices = @transform_4, window_bounds = array<i64: 8, 128>}, {pipeline_mode = #tpu.pipeline_mode<synchronous>, transform_indices = @transform_5, window_bounds = array<i64: 16, 128>}]} {
    %c0 = arith.constant 0 : index
    %c0_0 = arith.constant 0 : index
    %0 = vector.load %arg1[%c0, %c0_0] : memref<16x16xbf16, #tpu.memory_space<vmem>>, vector<16x16xbf16>
    %c0_1 = arith.constant 0 : index
    %c0_2 = arith.constant 0 : index
    %1 = vector.load %arg2[%c0_1, %c0_2] : memref<16x128xbf16, #tpu.memory_space<vmem>>, vector<16x128xbf16>
    %cst = arith.constant dense<0.000000e+00> : vector<16x128xf32>
    %2 = tpu.matmul %0, %1, %cst {dimension_numbers = #tpu.dot_dimension_numbers<[1], [0], [0], [1], [0, 0, 1, 1], [], []>} : vector<16x16xbf16>, vector<16x128xbf16>, vector<16x128xf32> -> vector<16x128xf32>
    %c0_3 = arith.constant 0 : index
    %c0_4 = arith.constant 0 : index
    %3 = vector.load %arg5[%c0_3, %c0_4] : memref<8x128xf32, #tpu.memory_space<vmem>>, vector<1x128xf32>
    %4 = vector.broadcast %3 : vector<1x128xf32> to vector<16x128xf32>
    %5 = arith.addf %2, %4 : vector<16x128xf32>
    %cst_5 = arith.constant 0.000000e+00 : f32
    %6 = vector.broadcast %cst_5 : f32 to vector<16x128xf32>
    %7 = arith.maximumf %5, %6 : vector<16x128xf32>
    %8 = tpu.iota {dimensions = array<i32: 0>} : vector<16x1xi32>
    %c8_i32 = arith.constant 8 : i32
    %9 = vector.broadcast %c8_i32 : i32 to vector<16x1xi32>
    %10 = arith.cmpi slt, %8, %9 : vector<16x1xi32>
    %cst_6 = arith.constant 0.000000e+00 : f32
    %11 = vector.shape_cast %10 : vector<16x1xi1> to vector<16x1xi1>
    %12 = vector.broadcast %11 : vector<16x1xi1> to vector<16x128xi1>
    %13 = vector.broadcast %cst_6 : f32 to vector<16x128xf32>
    %14 = arith.select %12, %7, %13 : vector<16x128xi1>, vector<16x128xf32>
    %cst_7 = arith.constant dense<0.000000e+00> : vector<128xf32>
    %15 = vector.multi_reduction <add>, %14, %cst_7 [0] : vector<16x128xf32> to vector<128xf32>
    %16 = vector.shape_cast %15 : vector<128xf32> to vector<1x128xf32>
    %17 = arith.mulf %14, %14 : vector<16x128xf32>
    %cst_8 = arith.constant dense<0.000000e+00> : vector<128xf32>
    %18 = vector.multi_reduction <add>, %17, %cst_8 [0] : vector<16x128xf32> to vector<128xf32>
    %19 = vector.shape_cast %18 : vector<128xf32> to vector<1x128xf32>
    %c1 = arith.constant 1 : index
    %c0_9 = arith.constant 0 : index
    %20 = vector.load %arg5[%c1, %c0_9] : memref<8x128xf32, #tpu.memory_space<vmem>>, vector<1x128xf32>
    %c2 = arith.constant 2 : index
    %c0_10 = arith.constant 0 : index
    %21 = vector.load %arg5[%c2, %c0_10] : memref<8x128xf32, #tpu.memory_space<vmem>>, vector<1x128xf32>
    %cst_11 = arith.constant 1.250000e-01 : f32
    %22 = vector.broadcast %cst_11 : f32 to vector<1x128xf32>
    %23 = arith.mulf %16, %22 : vector<1x128xf32>
    %cst_12 = arith.constant 1.250000e-01 : f32
    %24 = vector.broadcast %cst_12 : f32 to vector<1x128xf32>
    %25 = arith.mulf %19, %24 : vector<1x128xf32>
    %26 = arith.mulf %23, %23 : vector<1x128xf32>
    %27 = arith.subf %25, %26 : vector<1x128xf32>
    %cst_13 = arith.constant 0.000000e+00 : f32
    %28 = vector.broadcast %cst_13 : f32 to vector<1x128xf32>
    %29 = arith.maximumf %27, %28 : vector<1x128xf32>
    %cst_14 = arith.constant 9.99999974E-6 : f32
    %30 = vector.broadcast %cst_14 : f32 to vector<1x128xf32>
    %31 = arith.addf %29, %30 : vector<1x128xf32>
    %32 = math.rsqrt %31 : vector<1x128xf32>
    %33 = arith.mulf %20, %32 : vector<1x128xf32>
    %34 = arith.mulf %23, %33 : vector<1x128xf32>
    %35 = arith.subf %21, %34 : vector<1x128xf32>
    %36 = vector.broadcast %33 : vector<1x128xf32> to vector<16x128xf32>
    %37 = arith.mulf %7, %36 : vector<16x128xf32>
    %38 = vector.broadcast %35 : vector<1x128xf32> to vector<16x128xf32>
    %39 = arith.addf %37, %38 : vector<16x128xf32>
    %40 = arith.truncf %39 : vector<16x128xf32> to vector<16x128xbf16>
    %c0_15 = arith.constant 0 : index
    %c0_16 = arith.constant 0 : index
    %41 = vector.load %arg3[%c0_15, %c0_16] : memref<128x128xbf16, #tpu.memory_space<vmem>>, vector<128x128xbf16>
    %cst_17 = arith.constant dense<0.000000e+00> : vector<16x128xf32>
    %42 = tpu.matmul %40, %41, %cst_17 {dimension_numbers = #tpu.dot_dimension_numbers<[1], [0], [0], [1], [0, 0, 1, 1], [], []>} : vector<16x128xbf16>, vector<128x128xbf16>, vector<16x128xf32> -> vector<16x128xf32>
    %c3 = arith.constant 3 : index
    %c0_18 = arith.constant 0 : index
    %43 = vector.load %arg5[%c3, %c0_18] : memref<8x128xf32, #tpu.memory_space<vmem>>, vector<1x128xf32>
    %44 = vector.broadcast %43 : vector<1x128xf32> to vector<16x128xf32>
    %45 = arith.addf %42, %44 : vector<16x128xf32>
    %cst_19 = arith.constant 0.000000e+00 : f32
    %46 = vector.broadcast %cst_19 : f32 to vector<16x128xf32>
    %47 = arith.maximumf %45, %46 : vector<16x128xf32>
    %48 = arith.truncf %47 : vector<16x128xf32> to vector<16x128xbf16>
    %c0_20 = arith.constant 0 : index
    %c0_21 = arith.constant 0 : index
    %49 = vector.load %arg4[%c0_20, %c0_21] : memref<128x128xbf16, #tpu.memory_space<vmem>>, vector<128x128xbf16>
    %cst_22 = arith.constant dense<0.000000e+00> : vector<16x128xf32>
    %50 = tpu.matmul %48, %49, %cst_22 {dimension_numbers = #tpu.dot_dimension_numbers<[1], [0], [0], [1], [0, 0, 1, 1], [], []>} : vector<16x128xbf16>, vector<128x128xbf16>, vector<16x128xf32> -> vector<16x128xf32>
    %c4 = arith.constant 4 : index
    %c0_23 = arith.constant 0 : index
    %51 = vector.load %arg5[%c4, %c0_23] : memref<8x128xf32, #tpu.memory_space<vmem>>, vector<1x128xf32>
    %52 = vector.broadcast %51 : vector<1x128xf32> to vector<16x128xf32>
    %53 = arith.addf %50, %52 : vector<16x128xf32>
    %54 = math.tanh %53 : vector<16x128xf32>
    %c0_24 = arith.constant 0 : index
    %c0_25 = arith.constant 0 : index
    %55 = vector.load %arg6[%c0_24, %c0_25] : memref<16x128xf32, #tpu.memory_space<vmem>>, vector<16x128xf32>
    tpu.vector_store %arg6[%c0_24, %c0_25], %54 {strides = array<i32>} : memref<16x128xf32, #tpu.memory_space<vmem>>, vector<16x128xf32>,
    return
  }
  func.func @transform_0(%arg0: i32) -> (i32, i32) {
    %c0_i32 = arith.constant 0 : i32
    %c0_i32_0 = arith.constant 0 : i32
    %c0_i32_1 = arith.constant 0 : i32
    return %c0_i32, %c0_i32_0 : i32, i32
  }
  func.func @transform_1(%arg0: i32) -> (i32, i32) {
    %c0_i32 = arith.constant 0 : i32
    %c0_i32_0 = arith.constant 0 : i32
    %c0_i32_1 = arith.constant 0 : i32
    return %c0_i32, %c0_i32_0 : i32, i32
  }
  func.func @transform_2(%arg0: i32) -> (i32, i32) {
    %c0_i32 = arith.constant 0 : i32
    %c0_i32_0 = arith.constant 0 : i32
    %c0_i32_1 = arith.constant 0 : i32
    return %c0_i32, %c0_i32_0 : i32, i32
  }
  func.func @transform_3(%arg0: i32) -> (i32, i32) {
    %c0_i32 = arith.constant 0 : i32
    %c0_i32_0 = arith.constant 0 : i32
    %c0_i32_1 = arith.constant 0 : i32
    return %c0_i32, %c0_i32_0 : i32, i32
  }
  func.func @transform_4(%arg0: i32) -> (i32, i32) {
    %c0_i32 = arith.constant 0 : i32
    %c0_i32_0 = arith.constant 0 : i32
    %c0_i32_1 = arith.constant 0 : i32
    return %c0_i32, %c0_i32_0 : i32, i32
  }
  func.func @transform_5(%arg0: i32) -> (i32, i32) {
    %c0_i32 = arith.constant 0 : i32
    %c0_i32_0 = arith.constant 0 : i32
    %c0_i32_1 = arith.constant 0 : i32
    return %c0_i32, %c0_i32_0 : i32, i32
  }
}

</mosaic_0001>

<llo_original>
// kernel: tpu_custom_call.1
$region0: #{tpu_custom_call.1}
  #allocation0 [shape = 'u32[]', space=smem, size = 0x4, offset = 0x4, fixed_abs, tag = 'smem constant byte address 0x4 - core index']
  #allocation1 [shape = 'u32[72,128]{1,0:T(1,128)}', space=vmem, size = 0x9000, scoped, tag = 'internal scratch']
  %s0 = inlined_call_operand.hbm [shape: bf16[16,16], index: 0, kind: input, shape index: {}]
  %s1 = inlined_call_operand.hbm [shape: bf16[16,128], index: 1, kind: input, shape index: {}]
  %s2 = inlined_call_operand.hbm [shape: bf16[128,128], index: 2, kind: input, shape index: {}]
  %s3 = inlined_call_operand.hbm [shape: bf16[128,128], index: 3, kind: input, shape index: {}]
  %s4 = inlined_call_operand.hbm [shape: f32[8,128], index: 4, kind: input, shape index: {}]
  %s5 = inlined_call_operand.hbm [shape: f32[16,128], index: 5, kind: output, shape index: {}]
  %s6 = sld [smem:[#allocation0]]
  $region50: #{tpu_custom_call.1} parent=0
    _
  %s8 = ssub.s32 1, %s6
  %s9 = scalar_select 0, %s8, %s6
  $region1: #{tpu_custom_call.1} parent=0
    #allocation2 [shape = 'u8[4096]{0}', space=vmem, size = 0x1000, scoped, tag = 'input window, operand 0, single buffered']
    #allocation3 [shape = 's32[1]{0}', space=sflag, size = 0x4, scoped, tag = 'scoped memory for tpu_custom_call.1']
    #allocation4 [shape = 's32[1]{0}', space=sflag, size = 0x4, scoped, tag = 'scoped memory for tpu_custom_call.1']
    #allocation5 [shape = 'u8[4096]{0}', space=vmem, size = 0x1000, scoped, tag = 'input window, operand 1, single buffered']
    #allocation6 [shape = 's32[1]{0}', space=sflag, size = 0x4, scoped, tag = 'scoped memory for tpu_custom_call.1']
    #allocation7 [shape = 'u8[32768]{0}', space=vmem, size = 0x8000, scoped, tag = 'input window, operand 2, single buffered']
    #allocation8 [shape = 'u8[32768]{0}', space=vmem, size = 0x8000, scoped, tag = 'input window, operand 3, single buffered']
    #allocation9 [shape = 's32[1]{0}', space=sflag, size = 0x4, scoped, tag = 'scoped memory for tpu_custom_call.1']
    #allocation10 [shape = 'u8[4096]{0}', space=vmem, size = 0x1000, scoped, tag = 'input window, operand 4, single buffered']
    #allocation11 [shape = 'u8[8192]{0}', space=vmem, size = 0x2000, scoped, tag = 'output window, operand 0, single buffered']
    %10 = vsyncpa [#allocation3], 0
    %11 = vsyncpa [#allocation6], 0
    %12 = vsyncpa [#allocation9], 0
    %13 = vsyncpa [#allocation4], 0
    // Predicated region
    $region2: #{tpu_custom_call.1} parent=1 // pred_check
      _
    $region3: #{tpu_custom_call.1} parent=1 // pred_check_branch
      %15 = sbr.rel (0) target = $region5
    $region4: #{tpu_custom_call.1} parent=1 // pred_region
      %17 = vsyncadd [#allocation3], 0
      %s18 = sshll.u32 %s0, 4
      %s19 = int_to_ptr.hbm [resolvable:$true] %s18
      %s20 = sshll.u32 [#allocation2], 4
      %s21 = int_to_ptr.vmem [resolvable:$true] %s20
      %26 = dma.hbm_to_vmem [thread:$0]  %s19, 128, %s21, [#allocation3], 64, 64, 4
    $region5: #{tpu_custom_call.1} parent=1 // pred_fallthru
      _
    // Predicated region
    $region6: #{tpu_custom_call.1} parent=1 // pred_check
      _
    $region7: #{tpu_custom_call.1} parent=1 // pred_check_branch
      %28 = sbr.rel (0) target = $region9
    $region8: #{tpu_custom_call.1} parent=1 // pred_region
      %30 = vsyncadd [#allocation6], 0
      %s31 = sshll.u32 %s1, 4
      %s32 = int_to_ptr.hbm [resolvable:$true] %s31
      %s33 = sshll.u32 [#allocation5], 4
      %s34 = int_to_ptr.vmem [resolvable:$true] %s33
      %39 = dma.hbm_to_vmem [thread:$0]  %s32, 128, %s34, [#allocation6], 64, 64, 4
    $region9: #{tpu_custom_call.1} parent=1 // pred_fallthru
      _
    // Predicated region
    $region10: #{tpu_custom_call.1} parent=1 // pred_check
      _
    $region11: #{tpu_custom_call.1} parent=1 // pred_check_branch
      %41 = sbr.rel (0) target = $region13
    $region12: #{tpu_custom_call.1} parent=1 // pred_region
      %43 = vsyncadd [#allocation6], 0
      %s44 = sshll.u32 %s2, 4
      %s45 = int_to_ptr.hbm [resolvable:$true] %s44
      %s46 = sshll.u32 [#allocation7], 4
      %s47 = int_to_ptr.vmem [resolvable:$true] %s46
      %52 = dma.hbm_to_vmem [thread:$0]  %s45, 1024, %s47, [#allocation6], 64, 64, 4
    $region13: #{tpu_custom_call.1} parent=1 // pred_fallthru
      _
    // Predicated region
    $region14: #{tpu_custom_call.1} parent=1 // pred_check
      _
    $region15: #{tpu_custom_call.1} parent=1 // pred_check_branch
      %54 = sbr.rel (0) target = $region17
    $region16: #{tpu_custom_call.1} parent=1 // pred_region
      %56 = vsyncadd [#allocation9], 0
      %s57 = sshll.u32 %s3, 4
      %s58 = int_to_ptr.hbm [resolvable:$true] %s57
      %s59 = sshll.u32 [#allocation8], 4
      %s60 = int_to_ptr.vmem [resolvable:$true] %s59
      %65 = dma.hbm_to_vmem [thread:$0]  %s58, 1024, %s60, [#allocation9], 64, 64, 4
    $region17: #{tpu_custom_call.1} parent=1 // pred_fallthru
      _
    // Predicated region
    $region18: #{tpu_custom_call.1} parent=1 // pred_check
      _
    $region19: #{tpu_custom_call.1} parent=1 // pred_check_branch
      %67 = sbr.rel (0) target = $region21
    $region20: #{tpu_custom_call.1} parent=1 // pred_region
      %69 = vsyncadd [#allocation9], 0
      %s71 = sshll.u32 %s4, 4
      %s72 = int_to_ptr.hbm [resolvable:$true] %s71
      %s73 = sshll.u32 [#allocation10], 4
      %s74 = int_to_ptr.vmem [resolvable:$true] %s73
      %76 = dma.hbm_to_vmem [thread:$0]  %s72, 128, %s74, [#allocation9]
    $region21: #{tpu_custom_call.1} parent=1 // pred_fallthru
      _
    // Predicated region
    $region22: #{tpu_custom_call.1} parent=1 // pred_check
      _
    $region23: #{tpu_custom_call.1} parent=1 // pred_check_branch
      %78 = sbr.rel (0) target = $region25
    $region24: #{tpu_custom_call.1} parent=1 // pred_region
      %80 = dma.done [#allocation3], 128
    $region25: #{tpu_custom_call.1} parent=1 // pred_fallthru
      _
    // Predicated region
    $region26: #{tpu_custom_call.1} parent=1 // pred_check
      _
    $region27: #{tpu_custom_call.1} parent=1 // pred_check_branch
      %82 = sbr.rel (0) target = $region29
    $region28: #{tpu_custom_call.1} parent=1 // pred_region
      %84 = dma.done [#allocation6], 128
    $region29: #{tpu_custom_call.1} parent=1 // pred_fallthru
      _
    // Predicated region
    $region30: #{tpu_custom_call.1} parent=1 // pred_check
      _
    $region31: #{tpu_custom_call.1} parent=1 // pred_check_branch
      %86 = sbr.rel (0) target = $region33
    $region32: #{tpu_custom_call.1} parent=1 // pred_region
      %88 = dma.done [#allocation6], 1024
    $region33: #{tpu_custom_call.1} parent=1 // pred_fallthru
      _
    // Predicated region
    $region34: #{tpu_custom_call.1} parent=1 // pred_check
      _
    $region35: #{tpu_custom_call.1} parent=1 // pred_check_branch
      %90 = sbr.rel (0) target = $region37
    $region36: #{tpu_custom_call.1} parent=1 // pred_region
      %92 = dma.done [#allocation9], 1024
    $region37: #{tpu_custom_call.1} parent=1 // pred_fallthru
      _
    // Predicated region
    $region38: #{tpu_custom_call.1} parent=1 // pred_check
      _
    $region39: #{tpu_custom_call.1} parent=1 // pred_check_branch
      %94 = sbr.rel (0) target = $region41
    $region40: #{tpu_custom_call.1} parent=1 // pred_region
      %96 = dma.done [#allocation9], 128
    $region41: #{tpu_custom_call.1} parent=1 // pred_fallthru
      _
    %v98 = vld [vmem:[#allocation2] sm:$0xf]
    %v99 = vld [vmem:[#allocation2 + $0x4] sm:$0xf]
    %v100 = vld [vmem:[#allocation5] sm:$0xf]
    %v101 = vld [vmem:[#allocation5 + $0x4] sm:$0xf]
    %v102 = vld [vmem:[#allocation10] sm:$0x1]
    %v103 = vperm.slane %v102, 0
    %v106 = vunpack.c.l.b16 %v98
    %v107 = vunpack.c.l.b16 %v99
    %v108 = vpack.c.b16 %v107, %v106
    %v111 = vunpack.c.l.b16 %v100
    %v112 = vunpack.c.l.b16 %v101
    %v113 = vpack.c.b16 %v112, %v111
    %vm115 = vcmask 130048
    %v117 = vsel %vm115, %v108, 0
    %119 = vmatpush.bf16.msra.mxu0 0
    %120 = vmatpush.bf16.msra.mxu0 0
    %121 = vmatpush.bf16.msra.mxu0 0
    %122 = vmatpush.bf16.msra.mxu0 0
    %123 = vmatpush.bf16.msra.mxu0 0
    %124 = vmatpush.bf16.msra.mxu0 0
    %125 = vmatpush.bf16.msra.mxu0 0
    %126 = vmatpush.bf16.msra.mxu0 %v113
    %127 = vmatmul.bf16.gmra.mxu0 %v117
    %v128 = vpop.f32.mrf.mxu0
    %v129 = vadd.f32 %v103, %v128
    %v130 = vpop.f32.mrf.mxu0
    %v131 = vadd.f32 %v103, %v130
    %132 = vdwg.mxu0
    %v133 = vmax.f32 %v129, 0.0
    %v134 = vmax.f32 %v131, 0.0
    %v135 = vlaneseq
    %v136 = vshrl.u32 %v135, 7
    %v137 = vadd.s32 %v136, 8
    %vm138 = vcmp.lt.s32.totalorder %v136, 8
    %vm139 = vcmp.lt.s32.totalorder %v137, 8
    %v140 = vsel %vm138, 1, 0
    %v141 = vsel %vm139, 1, 0
    %vm142 = vcmp.eq.s32.totalorder %v140, 1
    %vm143 = vcmp.eq.s32.totalorder %v141, 1
    %v144 = vsel %vm142, %v133, 0.0
    %v145 = vsel %vm143, %v134, 0.0
    %v146 = vadd.f32 %v144, %v145
    %v147 = vrot.slane %v146, 4
    %v148 = vadd.f32 %v146, %v147
    %v149 = vrot.slane %v148, 2
    %v150 = vadd.f32 %v148, %v149
    %v151 = vrot.slane %v150, 1
    %v152 = vadd.f32 %v150, %v151
    %v153 = vmul.f32 %v144, %v144
    %v154 = vmul.f32 %v145, %v145
    %v155 = vadd.f32 %v153, %v154
    %v156 = vrot.slane %v155, 4
    %v157 = vadd.f32 %v155, %v156
    %v158 = vrot.slane %v157, 2
    %v159 = vadd.f32 %v157, %v158
    %v160 = vrot.slane %v159, 1
    %v161 = vadd.f32 %v159, %v160
    %v162 = vld [vmem:[#allocation10 + $0x1] sm:$0x1]
    %v163 = vld [vmem:[#allocation10 + $0x2] sm:$0x1]
    %v164 = vmul.f32 %v152, 0.125
    %v165 = vmul.f32 %v161, 0.125
    %v166 = vmul.f32 %v164, %v164
    %v167 = vsub.f32 %v165, %v166
    %v168 = vmax.f32 %v167, 0.0
    %v169 = vadd.f32 %v168, 1e-05
    %v170 = vrsqrt.pop %v169
    %v171 = vmul.f32 %v170, %v169
    %v172 = vmul.f32 %v171, %v170
    %v173 = vmul.f32 0.5, %v172
    %v174 = vsub.f32 1.5, %v173
    %v175 = vmul.f32 %v170, %v174
    %vm176 = vweird.f32 %v169
    %vm177 = vweird.f32 %v170
    %vm178 = vmor %vm176, %vm177
    %v179 = vsel %vm178, %v170, %v175
    %v180 = vmul.f32 %v162, %v179
    %v181 = vmul.f32 %v164, %v180
    %v182 = vsub.f32 %v163, %v181
    %v183 = vperm.slane %v180, 0
    %v184 = vmul.f32 %v133, %v183
    %v185 = vmul.f32 %v134, %v183
    %v186 = vperm.slane %v182, 0
    %v187 = vadd.f32 %v184, %v186
    %v188 = vadd.f32 %v185, %v186
    %v189 = vpack.c.bf16 %v188, %v187
    %v190 = vld [vmem:[#allocation7] sm:$0xf]
    %v191 = vld [vmem:[#allocation7 + $0x4] sm:$0xf]
    %v192 = vld [vmem:[#allocation7 + $0x8] sm:$0xf]
    %v193 = vld [vmem:[#allocation7 + $0xc] sm:$0xf]
    %v194 = vld [vmem:[#allocation7 + $0x10] sm:$0xf]
    %v195 = vld [vmem:[#allocation7 + $0x14] sm:$0xf]
    %v196 = vld [vmem:[#allocation7 + $0x18] sm:$0xf]
    %v197 = vld [vmem:[#allocation7 + $0x1c] sm:$0xf]
    %v198 = vld [vmem:[#allocation7 + $0x20] sm:$0xf]
    %v199 = vld [vmem:[#allocation7 + $0x24] sm:$0xf]
    %v200 = vld [vmem:[#allocation7 + $0x28] sm:$0xf]
    %v201 = vld [vmem:[#allocation7 + $0x2c] sm:$0xf]
    %v202 = vld [vmem:[#allocation7 + $0x30] sm:$0xf]
    %v203 = vld [vmem:[#allocation7 + $0x34] sm:$0xf]
    %v204 = vld [vmem:[#allocation7 + $0x38] sm:$0xf]
    %v205 = vld [vmem:[#allocation7 + $0x3c] sm:$0xf]
    %v206 = vld [vmem:[#allocation10 + $0x3] sm:$0x1]
    %v207 = vperm.slane %v206, 0
    %v224 = vunpack.c.l.b16 %v190
    %v225 = vunpack.c.l.b16 %v191
    %v226 = vunpack.c.l.b16 %v192
    %v227 = vunpack.c.l.b16 %v193
    %v228 = vunpack.c.l.b16 %v194
    %v229 = vunpack.c.l.b16 %v195
    %v230 = vunpack.c.l.b16 %v196
    %v231 = vunpack.c.l.b16 %v197
    %v232 = vunpack.c.l.b16 %v198
    %v233 = vunpack.c.l.b16 %v199
    %v234 = vunpack.c.l.b16 %v200
    %v235 = vunpack.c.l.b16 %v201
    %v236 = vunpack.c.l.b16 %v202
    %v237 = vunpack.c.l.b16 %v203
    %v238 = vunpack.c.l.b16 %v204
    %v239 = vunpack.c.l.b16 %v205
    %v240 = vpack.c.b16 %v225, %v224
    %v241 = vpack.c.b16 %v227, %v226
    %v242 = vpack.c.b16 %v229, %v228
    %v243 = vpack.c.b16 %v231, %v230
    %v244 = vpack.c.b16 %v233, %v232
    %v245 = vpack.c.b16 %v235, %v234
    %v246 = vpack.c.b16 %v237, %v236
    %v247 = vpack.c.b16 %v239, %v238
    %256 = vmatpush.bf16.msra.mxu0 %v247
    %257 = vmatpush.bf16.msra.mxu0 %v246
    %258 = vmatpush.bf16.msra.mxu0 %v245
    %259 = vmatpush.bf16.msra.mxu0 %v244
    %260 = vmatpush.bf16.msra.mxu0 %v243
    %261 = vmatpush.bf16.msra.mxu0 %v242
    %262 = vmatpush.bf16.msra.mxu0 %v241
    %263 = vmatpush.bf16.msra.mxu0 %v240
    %264 = vmatmul.bf16.gmra.mxu0 %v189
    %v265 = vpop.f32.mrf.mxu0
    %v266 = vadd.f32 %v207, %v265
    %v267 = vpop.f32.mrf.mxu0
    %v268 = vadd.f32 %v207, %v267
    %269 = vdwg.mxu0
    %v270 = vmax.f32 %v266, 0.0
    %v271 = vmax.f32 %v268, 0.0
    %v272 = vpack.c.bf16 %v271, %v270
    %v273 = vld [vmem:[#allocation8] sm:$0xf]
    %v274 = vld [vmem:[#allocation8 + $0x4] sm:$0xf]
    %v275 = vld [vmem:[#allocation8 + $0x8] sm:$0xf]
    %v276 = vld [vmem:[#allocation8 + $0xc] sm:$0xf]
    %v277 = vld [vmem:[#allocation8 + $0x10] sm:$0xf]
    %v278 = vld [vmem:[#allocation8 + $0x14] sm:$0xf]
    %v279 = vld [vmem:[#allocation8 + $0x18] sm:$0xf]
    %v280 = vld [vmem:[#allocation8 + $0x1c] sm:$0xf]
    %v281 = vld [vmem:[#allocation8 + $0x20] sm:$0xf]
    %v282 = vld [vmem:[#allocation8 + $0x24] sm:$0xf]
    %v283 = vld [vmem:[#allocation8 + $0x28] sm:$0xf]
    %v284 = vld [vmem:[#allocation8 + $0x2c] sm:$0xf]
    %v285 = vld [vmem:[#allocation8 + $0x30] sm:$0xf]
    %v286 = vld [vmem:[#allocation8 + $0x34] sm:$0xf]
    %v287 = vld [vmem:[#allocation8 + $0x38] sm:$0xf]
    %v288 = vld [vmem:[#allocation8 + $0x3c] sm:$0xf]
    %v289 = vld [vmem:[#allocation10 + $0x4] sm:$0x1]
    %v290 = vperm.slane %v289, 0
    %v307 = vunpack.c.l.b16 %v273
    %v308 = vunpack.c.l.b16 %v274
    %v309 = vunpack.c.l.b16 %v275
    %v310 = vunpack.c.l.b16 %v276
    %v311 = vunpack.c.l.b16 %v277
    %v312 = vunpack.c.l.b16 %v278
    %v313 = vunpack.c.l.b16 %v279
    %v314 = vunpack.c.l.b16 %v280
    %v315 = vunpack.c.l.b16 %v281
    %v316 = vunpack.c.l.b16 %v282
    %v317 = vunpack.c.l.b16 %v283
    %v318 = vunpack.c.l.b16 %v284
    %v319 = vunpack.c.l.b16 %v285
    %v320 = vunpack.c.l.b16 %v286
    %v321 = vunpack.c.l.b16 %v287
    %v322 = vunpack.c.l.b16 %v288
    %v323 = vpack.c.b16 %v308, %v307
    %v324 = vpack.c.b16 %v310, %v309
    %v325 = vpack.c.b16 %v312, %v311
    %v326 = vpack.c.b16 %v314, %v313
    %v327 = vpack.c.b16 %v316, %v315
    %v328 = vpack.c.b16 %v318, %v317
    %v329 = vpack.c.b16 %v320, %v319
    %v330 = vpack.c.b16 %v322, %v321
    %339 = vmatpush.bf16.msra.mxu0 %v330
    %340 = vmatpush.bf16.msra.mxu0 %v329
    %341 = vmatpush.bf16.msra.mxu0 %v328
    %342 = vmatpush.bf16.msra.mxu0 %v327
    %343 = vmatpush.bf16.msra.mxu0 %v326
    %344 = vmatpush.bf16.msra.mxu0 %v325
    %345 = vmatpush.bf16.msra.mxu0 %v324
    %346 = vmatpush.bf16.msra.mxu0 %v323
    %347 = vmatmul.bf16.gmra.mxu0 %v272
    %v348 = vpop.f32.mrf.mxu0
    %v349 = vadd.f32 %v290, %v348
    %v350 = vpop.f32.mrf.mxu0
    %v351 = vadd.f32 %v290, %v350
    %352 = vdwg.mxu0
    %v353 = vtanh.pop %v349
    %v354 = vtanh.pop %v351
    %355 = vst [vmem:[#allocation11] sm:$0xff] %v353
    %356 = vst [vmem:[#allocation11 + $0x8] sm:$0xff] %v354
    // Predicated region
    $region42: #{tpu_custom_call.1} parent=1 // pred_check
      _
    $region43: #{tpu_custom_call.1} parent=1 // pred_check_branch
      %358 = sbr.rel (0) target = $region45
    $region44: #{tpu_custom_call.1} parent=1 // pred_region
      %360 = vsyncadd [#allocation4], 0
      %s361 = sshll.u32 [#allocation11], 4
      %s362 = int_to_ptr.vmem [resolvable:$true] %s361
      %s363 = sshll.u32 %s5, 4
      %s364 = int_to_ptr.hbm [resolvable:$true] %s363
      %369 = dma.vmem_to_hbm [thread:$0]  %s362, 256, %s364, [#allocation4], 128, 128, 8
    $region45: #{tpu_custom_call.1} parent=1 // pred_fallthru
      _
    // Predicated region
    $region46: #{tpu_custom_call.1} parent=1 // pred_check
      _
    $region47: #{tpu_custom_call.1} parent=1 // pred_check_branch
      %371 = sbr.rel (0) target = $region49
    $region48: #{tpu_custom_call.1} parent=1 // pred_region
      %373 = dma.done [#allocation4], 256
    $region49: #{tpu_custom_call.1} parent=1 // pred_fallthru
      _
    %374 = vsyncpa [#allocation3], 1
    %375 = vsyncpa [#allocation6], 1
    %376 = vsyncpa [#allocation9], 1
    %377 = vsyncpa [#allocation4], 1

</llo_original>
